<compile_context>
chip_gen: v5e
topology: v5e:2x2
jax: 0.10.0
libtpu: 0.0.40
codegen_flags: <defaults>
</compile_context>

<pallas_src>
import jax
import jax.numpy as jnp
from jax.experimental import pallas as pl
from jax.experimental.pallas import tpu as pltpu


def _round_up(x, m):
    return ((x + m - 1) // m) * m


def text_feature_kernel(h_ref, w_ref, b_ref, pm_ref, enc_ref, pos_ref):
    # h_ref:   (Bt, S, Hb) bf16   caption-block of BERT hidden states
    # w_ref:   (Hb, D)     bf16   feat_map weight, pre-transposed once in wrapper
    # b_ref:   (1, D)      f32    feat_map bias
    # pm_ref:  (Bt, P, S)  bf16   positive maps (spans x tokens), 0/1 exact in bf16
    # enc_ref: (Bt, S, D)  bf16   encoded_text output
    # pos_ref: (Bt, P, D)  f32    normalized positive_features output
    Bt, S, Hb = h_ref.shape
    D = w_ref.shape[1]

    # Fold captions into the MXU M dim: (Bt*S, Hb) @ (Hb, D) -> (Bt*S, D), f32 acc.
    # Reshape only merges leading (sublane) dims; Hb stays lane-dense -> free.
    h2d = h_ref[...].reshape(Bt * S, Hb)
    enc = jnp.dot(h2d, w_ref[...], preferred_element_type=jnp.float32)
    enc = enc + b_ref[...]
    enc_bf = enc.astype(jnp.bfloat16).reshape(Bt, S, D)
    enc_ref[...] = enc_bf

    # Span-selected token sum as a batched bf16 MXU matmul, f32 accumulation:
    # (Bt, P, S) @ (Bt, S, D) -> (Bt, P, D).
    pf = jnp.einsum('bps,bsd->bpd', pm_ref[...], enc_bf,
                    preferred_element_type=jnp.float32)

    # L2 normalize per span; clamp the norm itself (not the squared norm) so
    # empty / padded spans map to zero instead of NaN.
    nrm = jnp.sqrt(jnp.sum(pf * pf, axis=-1, keepdims=True))
    pos_ref[...] = pf / jnp.maximum(nrm, 1e-12)


def text_feature_extractor(last_hidden_states, feat_map_weight, feat_map_bias,
                           positive_maps, *, target_block_rows=256):
    """
    last_hidden_states: (B, S, Hb)  -- stands in for bert(...)['last_hidden_state'] per caption
    feat_map_weight:    (D, Hb)     -- PyTorch nn.Linear layout (out, in)
    feat_map_bias:      (D,)
    positive_maps:      (B, P, S)   -- 1.0 for tokens inside each span, else 0.0
    returns: encoded_text (B, S, D) bf16, positive_features (B, P, D) f32
    """
    B, S, Hb = last_hidden_states.shape
    D = feat_map_weight.shape[0]
    P = positive_maps.shape[1]

    # ---- pad to TPU-friendly shapes ----
    Sp = _round_up(S, 16)      # bf16 sublane packing for h / enc
    Pp = _round_up(P, 16)      # bf16 sublane packing for pm (and full f32 sublanes for pos)
    Hp = _round_up(Hb, 128)    # lane-dense contraction dim
    Dp = _round_up(D, 128)     # lane-dense output dim

    # Caption block: fill the MXU M dimension (~target_block_rows rows per step).
    # Blocks here are tiny relative to scoped VMEM defaults (16 MiB v5e /
    # 32 MiB v6e-v7x); raise vmem_limit_bytes only if Bt*Sp*Hp grows past that.
    Bt = max(1, min(B, target_block_rows // Sp))
    Bp = _round_up(B, Bt)
    grid = Bp // Bt

    # ---- prepare padded device arrays (one-time host-side layout work) ----
    h = jnp.zeros((Bp, Sp, Hp), jnp.bfloat16).at[:B, :S, :Hb].set(
        last_hidden_states.astype(jnp.bfloat16))
    w = jnp.zeros((Hp, Dp), jnp.bfloat16).at[:Hb, :D].set(
        feat_map_weight.T.astype(jnp.bfloat16))          # single transpose, outside the kernel
    b = jnp.zeros((1, Dp), jnp.float32).at[0, :D].set(
        feat_map_bias.astype(jnp.float32))
    pm = jnp.zeros((Bp, Pp, Sp), jnp.bfloat16).at[:B, :P, :S].set(
        positive_maps.astype(jnp.bfloat16))

    enc_p, pos_p = pl.pallas_call(
        text_feature_kernel,
        out_shape=(
            jax.ShapeDtypeStruct((Bp, Sp, Dp), jnp.bfloat16),
            jax.ShapeDtypeStruct((Bp, Pp, Dp), jnp.float32),
        ),
        grid=(grid,),
        in_specs=[
            pl.BlockSpec((Bt, Sp, Hp), lambda i: (i, 0, 0)),  # caption-block hidden states
            pl.BlockSpec((Hp, Dp), lambda i: (0, 0)),         # shared weight (Hb, D)
            pl.BlockSpec((1, Dp), lambda i: (0, 0)),          # shared bias
            pl.BlockSpec((Bt, Pp, Sp), lambda i: (i, 0, 0)),  # caption-block positive maps
        ],
        out_specs=(
            pl.BlockSpec((Bt, Sp, Dp), lambda i: (i, 0, 0)),
            pl.BlockSpec((Bt, Pp, Dp), lambda i: (i, 0, 0)),
        ),
        compiler_params=pltpu.CompilerParams(
            dimension_semantics=("parallel",)),               # shard caption blocks across TCs
    )(h, w, b, pm)

    return enc_p[:B, :S, :D], pos_p[:B, :P, :D]


if __name__ == "__main__":
    # Small shapes consistent with the module: 2 captions, seq=8 tokens,
    # bert hidden=128 (stand-in for 768), feat_map output dim=256 (as in module),
    # 1 noun span per caption (matches token_span=[[[0, len(subnoun)]]]).
    B, S, HB, D, P = 2, 8, 128, 256, 1

    key = jax.random.PRNGKey(0)
    k_h, k_w = jax.random.split(key)

    # TODO(synk): the BERT tokenizer + encoder and all torch.load/save/json I/O
    # have no Pallas equivalent; a synthetic deterministic last_hidden_state
    # stands in for bert(...)['last_hidden_state'].
    last_hidden_states = jax.random.normal(k_h, (B, S, HB), dtype=jnp.float32)

    # feat_map = nn.Linear(HB, D): xavier_uniform weight, zero bias.
    xavier_bound = (6.0 / (HB + D)) ** 0.5
    feat_map_weight = jax.random.uniform(
        k_w, (D, HB), dtype=jnp.float32, minval=-xavier_bound, maxval=xavier_bound)
    feat_map_bias = jnp.zeros((D,), dtype=jnp.float32)

    # Positive maps: caption 0 -> tokens 1..3, caption 1 -> tokens 2..5
    # (stand-in for create_positive_map_from_span on the subnoun span).
    positive_maps = jnp.zeros((B, P, S), dtype=jnp.float32)
    positive_maps = positive_maps.at[0, 0, 1:4].set(1.0)
    positive_maps = positive_maps.at[1, 0, 2:6].set(1.0)

    enc, pos = text_feature_extractor(
        last_hidden_states, feat_map_weight, feat_map_bias, positive_maps)
    jax.block_until_ready((enc, pos))

    # Pure-JAX reference of the same math (matching the bf16 casts the kernel uses).
    h32 = last_hidden_states.astype(jnp.bfloat16).astype(jnp.float32)
    w32 = feat_map_weight.astype(jnp.bfloat16).astype(jnp.float32)
    enc_f32 = jnp.einsum('bsh,dh->bsd', h32, w32) + feat_map_bias
    enc_bf = enc_f32.astype(jnp.bfloat16).astype(jnp.float32)
    pf_ref = jnp.einsum('bps,bsd->bpd', positive_maps, enc_bf)
    nrm = jnp.maximum(
        jnp.sqrt(jnp.sum(pf_ref * pf_ref, axis=-1, keepdims=True)), 1e-12)
    pf_ref = pf_ref / nrm

    assert jnp.allclose(enc.astype(jnp.float32), enc_f32, atol=2e-2, rtol=2e-2), \
        "encoded_text mismatch"
    assert jnp.allclose(pos, pf_ref, atol=2e-3, rtol=2e-3), \
        "positive_features mismatch"

    print("KERNEL_OK")
</pallas_src>

<mosaic_0001>
module attributes {stable_mosaic.version = 11 : i64} {
  func.func @text_feature_kernel(%arg0: i32, %arg1: memref<2x16x128xbf16, #tpu.memory_space<vmem>>, %arg2: memref<128x256xbf16, #tpu.memory_space<vmem>>, %arg3: memref<1x256xf32, #tpu.memory_space<vmem>>, %arg4: memref<2x16x16xbf16, #tpu.memory_space<vmem>>, %arg5: memref<2x16x256xbf16, #tpu.memory_space<vmem>>, %arg6: memref<2x16x256xf32, #tpu.memory_space<vmem>>) attributes {dimension_semantics = [#tpu.dimension_semantics<parallel>], iteration_bounds = array<i64: 1>, scalar_prefetch = 0 : i64, scratch_operands = 0 : i64, tpu.core_type = #tpu.core_type<tc>, window_params = [{transform_indices = @transform_0, window_bounds = array<i64: 2, 16, 128>}, {pipeline_mode = #tpu.pipeline_mode<synchronous>, transform_indices = @transform_1, window_bounds = array<i64: 128, 256>}, {pipeline_mode = #tpu.pipeline_mode<synchronous>, transform_indices = @transform_2, window_bounds = array<i64: 1, 256>}, {transform_indices = @transform_3, window_bounds = array<i64: 2, 16, 16>}, {transform_indices = @transform_4, window_bounds = array<i64: 2, 16, 256>}, {transform_indices = @transform_5, window_bounds = array<i64: 2, 16, 256>}]} {
    %c0 = arith.constant 0 : index
    %c0_0 = arith.constant 0 : index
    %c0_1 = arith.constant 0 : index
    %0 = vector.load %arg1[%c0, %c0_0, %c0_1] : memref<2x16x128xbf16, #tpu.memory_space<vmem>>, vector<2x16x128xbf16>
    %1 = vector.shape_cast %0 : vector<2x16x128xbf16> to vector<32x128xbf16>
    %c0_2 = arith.constant 0 : index
    %c0_3 = arith.constant 0 : index
    %2 = vector.load %arg2[%c0_2, %c0_3] : memref<128x256xbf16, #tpu.memory_space<vmem>>, vector<128x256xbf16>
    %cst = arith.constant dense<0.000000e+00> : vector<32x256xf32>
    %3 = tpu.matmul %1, %2, %cst {dimension_numbers = #tpu.dot_dimension_numbers<[1], [0], [0], [1], [0, 0, 1, 1], [], []>} : vector<32x128xbf16>, vector<128x256xbf16>, vector<32x256xf32> -> vector<32x256xf32>
    %c0_4 = arith.constant 0 : index
    %c0_5 = arith.constant 0 : index
    %4 = vector.load %arg3[%c0_4, %c0_5] : memref<1x256xf32, #tpu.memory_space<vmem>>, vector<1x256xf32>
    %5 = vector.broadcast %4 : vector<1x256xf32> to vector<32x256xf32>
    %6 = arith.addf %3, %5 : vector<32x256xf32>
    %7 = arith.truncf %6 : vector<32x256xf32> to vector<32x256xbf16>
    %8 = vector.shape_cast %7 : vector<32x256xbf16> to vector<2x16x256xbf16>
    %c0_6 = arith.constant 0 : index
    %c0_7 = arith.constant 0 : index
    %c0_8 = arith.constant 0 : index
    %9 = vector.load %arg5[%c0_6, %c0_7, %c0_8] : memref<2x16x256xbf16, #tpu.memory_space<vmem>>, vector<2x16x256xbf16>
    tpu.vector_store %arg5[%c0_6, %c0_7, %c0_8], %8 {strides = array<i32>} : memref<2x16x256xbf16, #tpu.memory_space<vmem>>, vector<2x16x256xbf16>,
    %c0_9 = arith.constant 0 : index
    %c0_10 = arith.constant 0 : index
    %c0_11 = arith.constant 0 : index
    %10 = vector.load %arg4[%c0_9, %c0_10, %c0_11] : memref<2x16x16xbf16, #tpu.memory_space<vmem>>, vector<2x16x16xbf16>
    "tpu.trace_start"() <{level = 10 : i32, message = "bps,bsd->bpd"}> : () -> ()
    %cst_12 = arith.constant dense<0.000000e+00> : vector<2x16x256xf32>
    %11 = tpu.matmul %10, %8, %cst_12 {dimension_numbers = #tpu.dot_dimension_numbers<[2], [1], [1], [2], [0, 0, 0, 1, 1, 2], [0], [0]>} : vector<2x16x16xbf16>, vector<2x16x256xbf16>, vector<2x16x256xf32> -> vector<2x16x256xf32>
    "tpu.trace_stop"() : () -> ()
    %12 = arith.mulf %11, %11 : vector<2x16x256xf32>
    %cst_13 = arith.constant dense<0.000000e+00> : vector<2x16xf32>
    %13 = vector.multi_reduction <add>, %12, %cst_13 [2] : vector<2x16x256xf32> to vector<2x16xf32>
    %14 = vector.shape_cast %13 : vector<2x16xf32> to vector<2x16x1xf32>
    %15 = math.sqrt %14 : vector<2x16x1xf32>
    %cst_14 = arith.constant 9.99999996E-13 : f32
    %16 = vector.broadcast %cst_14 : f32 to vector<2x16x1xf32>
    %17 = arith.maximumf %15, %16 : vector<2x16x1xf32>
    %18 = vector.broadcast %17 : vector<2x16x1xf32> to vector<2x16x256xf32>
    %19 = arith.divf %11, %18 : vector<2x16x256xf32>
    %c0_15 = arith.constant 0 : index
    %c0_16 = arith.constant 0 : index
    %c0_17 = arith.constant 0 : index
    %20 = vector.load %arg6[%c0_15, %c0_16, %c0_17] : memref<2x16x256xf32, #tpu.memory_space<vmem>>, vector<2x16x256xf32>
    tpu.vector_store %arg6[%c0_15, %c0_16, %c0_17], %19 {strides = array<i32>} : memref<2x16x256xf32, #tpu.memory_space<vmem>>, vector<2x16x256xf32>,
    return
  }
  func.func @transform_0(%arg0: i32) -> (i32, i32, i32) {
    %c0_i32 = arith.constant 0 : i32
    %c0_i32_0 = arith.constant 0 : i32
    %c0_i32_1 = arith.constant 0 : i32
    return %arg0, %c0_i32, %c0_i32_0 : i32, i32, i32
  }
  func.func @transform_1(%arg0: i32) -> (i32, i32) {
    %c0_i32 = arith.constant 0 : i32
    %c0_i32_0 = arith.constant 0 : i32
    %c0_i32_1 = arith.constant 0 : i32
    return %c0_i32, %c0_i32_0 : i32, i32
  }
  func.func @transform_2(%arg0: i32) -> (i32, i32) {
    %c0_i32 = arith.constant 0 : i32
    %c0_i32_0 = arith.constant 0 : i32
    %c0_i32_1 = arith.constant 0 : i32
    return %c0_i32, %c0_i32_0 : i32, i32
  }
  func.func @transform_3(%arg0: i32) -> (i32, i32, i32) {
    %c0_i32 = arith.constant 0 : i32
    %c0_i32_0 = arith.constant 0 : i32
    %c0_i32_1 = arith.constant 0 : i32
    return %arg0, %c0_i32, %c0_i32_0 : i32, i32, i32
  }
  func.func @transform_4(%arg0: i32) -> (i32, i32, i32) {
    %c0_i32 = arith.constant 0 : i32
    %c0_i32_0 = arith.constant 0 : i32
    %c0_i32_1 = arith.constant 0 : i32
    return %arg0, %c0_i32, %c0_i32_0 : i32, i32, i32
  }
  func.func @transform_5(%arg0: i32) -> (i32, i32, i32) {
    %c0_i32 = arith.constant 0 : i32
    %c0_i32_0 = arith.constant 0 : i32
    %c0_i32_1 = arith.constant 0 : i32
    return %arg0, %c0_i32, %c0_i32_0 : i32, i32, i32
  }
}

</mosaic_0001>

<llo_original>
// kernel: tpu_custom_call.1
$region0: #{tpu_custom_call.1}
  #allocation0 [shape = 'u32[]', space=smem, size = 0x4, offset = 0x4, fixed_abs, tag = 'smem constant byte address 0x4 - core index']
  #allocation1 [shape = 'u32[72,128]{1,0:T(1,128)}', space=vmem, size = 0x9000, scoped, tag = 'internal scratch']
  %s0 = inlined_call_operand.hbm [shape: bf16[2,16,128], index: 0, kind: input, shape index: {}]
  %s1 = inlined_call_operand.hbm [shape: bf16[128,256], index: 1, kind: input, shape index: {}]
  %s2 = inlined_call_operand.hbm [shape: f32[1,256], index: 2, kind: input, shape index: {}]
  %s3 = inlined_call_operand.hbm [shape: bf16[2,16,16], index: 3, kind: input, shape index: {}]
  %s4 = inlined_call_operand.hbm [shape: bf16[2,16,256], index: 4, kind: output, shape index: {0}]
  %s5 = inlined_call_operand.hbm [shape: f32[2,16,256], index: 5, kind: output, shape index: {1}]
  %6 = xla_tuple %s4, %s5
  %s7 = sld [smem:[#allocation0]]
  $region50: #{tpu_custom_call.1} parent=0
    _
  %s9 = ssub.s32 1, %s7
  %s10 = scalar_select 0, %s9, %s7
  $region1: #{tpu_custom_call.1} parent=0
    #allocation2 [shape = 'u8[8192]{0}', space=vmem, size = 0x2000, scoped, tag = 'input window, operand 0, single buffered']
    #allocation3 [shape = 's32[1]{0}', space=sflag, size = 0x4, scoped, tag = 'scoped memory for tpu_custom_call.1']
    #allocation4 [shape = 's32[1]{0}', space=sflag, size = 0x4, scoped, tag = 'scoped memory for tpu_custom_call.1']
    #allocation5 [shape = 'u8[65536]{0}', space=vmem, size = 0x10000, scoped, tag = 'input window, operand 1, single buffered']
    #allocation6 [shape = 's32[1]{0}', space=sflag, size = 0x4, scoped, tag = 'scoped memory for tpu_custom_call.1']
    #allocation7 [shape = 'u8[1024]{0}', space=vmem, size = 0x400, scoped, tag = 'input window, operand 2, single buffered']
    #allocation8 [shape = 'u8[8192]{0}', space=vmem, size = 0x2000, scoped, tag = 'input window, operand 3, single buffered']
    #allocation9 [shape = 's32[1]{0}', space=sflag, size = 0x4, scoped, tag = 'scoped memory for tpu_custom_call.1']
    #allocation10 [shape = 'u8[16384]{0}', space=vmem, size = 0x4000, scoped, tag = 'output window, operand 0, single buffered']
    #allocation11 [shape = 'u8[32768]{0}', space=vmem, size = 0x8000, scoped, tag = 'output window, operand 1, single buffered']
    #allocation12 [shape = 's32[1]{0}', space=sflag, size = 0x4, scoped, tag = 'scoped memory for tpu_custom_call.1']
    %11 = vsyncpa [#allocation3], 0
    %12 = vsyncpa [#allocation6], 0
    %13 = vsyncpa [#allocation9], 0
    %14 = vsyncpa [#allocation4], 0
    %15 = vsyncpa [#allocation12], 0
    // Predicated region
    $region2: #{tpu_custom_call.1} parent=1 // pred_check
      _
    $region3: #{tpu_custom_call.1} parent=1 // pred_check_branch
      %17 = sbr.rel (0) target = $region5
    $region4: #{tpu_custom_call.1} parent=1 // pred_region
      %19 = vsyncadd [#allocation3], 0
      %s20 = sshll.u32 %s0, 4
      %s21 = int_to_ptr.hbm [resolvable:$true] %s20
      %s22 = sshll.u32 [#allocation2], 4
      %s23 = int_to_ptr.vmem [resolvable:$true] %s22
      %28 = dma.hbm_to_vmem [thread:$0]  %s21, 256, %s23, [#allocation3], 64, 64, 4
    $region5: #{tpu_custom_call.1} parent=1 // pred_fallthru
      _
    // Predicated region
    $region6: #{tpu_custom_call.1} parent=1 // pred_check
      _
    $region7: #{tpu_custom_call.1} parent=1 // pred_check_branch
      %30 = sbr.rel (0) target = $region9
    $region8: #{tpu_custom_call.1} parent=1 // pred_region
      %32 = vsyncadd [#allocation6], 0
      %s33 = sshll.u32 %s1, 4
      %s34 = int_to_ptr.hbm [resolvable:$true] %s33
      %s35 = sshll.u32 [#allocation5], 4
      %s36 = int_to_ptr.vmem [resolvable:$true] %s35
      %41 = dma.hbm_to_vmem [thread:$0]  %s34, 2048, %s36, [#allocation6], 128, 128, 8
    $region9: #{tpu_custom_call.1} parent=1 // pred_fallthru
      _
    // Predicated region
    $region10: #{tpu_custom_call.1} parent=1 // pred_check
      _
    $region11: #{tpu_custom_call.1} parent=1 // pred_check_branch
      %43 = sbr.rel (0) target = $region13
    $region12: #{tpu_custom_call.1} parent=1 // pred_region
      %45 = vsyncadd [#allocation6], 0
      %s47 = sshll.u32 %s2, 4
      %s48 = int_to_ptr.hbm [resolvable:$true] %s47
      %s49 = sshll.u32 [#allocation7], 4
      %s50 = int_to_ptr.vmem [resolvable:$true] %s49
      %52 = dma.hbm_to_vmem [thread:$0]  %s48, 32, %s50, [#allocation6]
    $region13: #{tpu_custom_call.1} parent=1 // pred_fallthru
      _
    // Predicated region
    $region14: #{tpu_custom_call.1} parent=1 // pred_check
      _
    $region15: #{tpu_custom_call.1} parent=1 // pred_check_branch
      %54 = sbr.rel (0) target = $region17
    $region16: #{tpu_custom_call.1} parent=1 // pred_region
      %56 = vsyncadd [#allocation9], 0
      %s57 = sshll.u32 %s3, 4
      %s58 = int_to_ptr.hbm [resolvable:$true] %s57
      %s59 = sshll.u32 [#allocation8], 4
      %s60 = int_to_ptr.vmem [resolvable:$true] %s59
      %65 = dma.hbm_to_vmem [thread:$0]  %s58, 256, %s60, [#allocation9], 64, 64, 4
    $region17: #{tpu_custom_call.1} parent=1 // pred_fallthru
      _
    // Predicated region
    $region18: #{tpu_custom_call.1} parent=1 // pred_check
      _
    $region19: #{tpu_custom_call.1} parent=1 // pred_check_branch
      %67 = sbr.rel (0) target = $region21
    $region20: #{tpu_custom_call.1} parent=1 // pred_region
      %69 = dma.done [#allocation3], 256
    $region21: #{tpu_custom_call.1} parent=1 // pred_fallthru
      _
    // Predicated region
    $region22: #{tpu_custom_call.1} parent=1 // pred_check
      _
    $region23: #{tpu_custom_call.1} parent=1 // pred_check_branch
      %71 = sbr.rel (0) target = $region25
    $region24: #{tpu_custom_call.1} parent=1 // pred_region
      %73 = dma.done [#allocation6], 2048
    $region25: #{tpu_custom_call.1} parent=1 // pred_fallthru
      _
    // Predicated region
    $region26: #{tpu_custom_call.1} parent=1 // pred_check
      _
    $region27: #{tpu_custom_call.1} parent=1 // pred_check_branch
      %75 = sbr.rel (0) target = $region29
    $region28: #{tpu_custom_call.1} parent=1 // pred_region
      %77 = dma.done [#allocation6], 32
    $region29: #{tpu_custom_call.1} parent=1 // pred_fallthru
      _
    // Predicated region
    $region30: #{tpu_custom_call.1} parent=1 // pred_check
      _
    $region31: #{tpu_custom_call.1} parent=1 // pred_check_branch
      %79 = sbr.rel (0) target = $region33
    $region32: #{tpu_custom_call.1} parent=1 // pred_region
      %81 = dma.done [#allocation9], 256
    $region33: #{tpu_custom_call.1} parent=1 // pred_fallthru
      _
    %v83 = vld [vmem:[#allocation2] sm:$0xf]
    %v84 = vld [vmem:[#allocation2 + $0x4] sm:$0xf]
    %v85 = vld [vmem:[#allocation2 + $0x8] sm:$0xf]
    %v86 = vld [vmem:[#allocation2 + $0xc] sm:$0xf]
    %v87 = vld [vmem:[#allocation5] sm:$0xff]
    %v88 = vld [vmem:[#allocation5 + $0x8] sm:$0xff]
    %v89 = vld [vmem:[#allocation5 + $0x10] sm:$0xff]
    %v90 = vld [vmem:[#allocation5 + $0x18] sm:$0xff]
    %v91 = vld [vmem:[#allocation5 + $0x20] sm:$0xff]
    %v92 = vld [vmem:[#allocation5 + $0x28] sm:$0xff]
    %v93 = vld [vmem:[#allocation5 + $0x30] sm:$0xff]
    %v94 = vld [vmem:[#allocation5 + $0x38] sm:$0xff]
    %v95 = vld [vmem:[#allocation5 + $0x40] sm:$0xff]
    %v96 = vld [vmem:[#allocation5 + $0x48] sm:$0xff]
    %v97 = vld [vmem:[#allocation5 + $0x50] sm:$0xff]
    %v98 = vld [vmem:[#allocation5 + $0x58] sm:$0xff]
    %v99 = vld [vmem:[#allocation5 + $0x60] sm:$0xff]
    %v100 = vld [vmem:[#allocation5 + $0x68] sm:$0xff]
    %v101 = vld [vmem:[#allocation5 + $0x70] sm:$0xff]
    %v102 = vld [vmem:[#allocation5 + $0x78] sm:$0xff]
    %v103 = vld [vmem:[#allocation7] sm:$0x3]
    %v105 = vperm.slane %v103, 0
    %v106 = vperm.slane %v103, 1
    %v113 = vunpack.c.l.b16 %v83
    %v114 = vunpack.c.l.b16 %v84
    %v115 = vunpack.c.l.b16 %v85
    %v116 = vunpack.c.l.b16 %v86
    %v117 = vpack.c.b16 %v114, %v113
    %v118 = vpack.c.b16 %v116, %v115
    %v137 = vunpack.c.l.b16 %v87
    %v138 = vunpack.c.h.b16 %v87
    %v139 = vunpack.c.l.b16 %v88
    %v140 = vunpack.c.h.b16 %v88
    %v141 = vunpack.c.l.b16 %v89
    %v142 = vunpack.c.h.b16 %v89
    %v143 = vunpack.c.l.b16 %v90
    %v144 = vunpack.c.h.b16 %v90
    %v145 = vunpack.c.l.b16 %v91
    %v146 = vunpack.c.h.b16 %v91
    %v147 = vunpack.c.l.b16 %v92
    %v148 = vunpack.c.h.b16 %v92
    %v149 = vunpack.c.l.b16 %v93
    %v150 = vunpack.c.h.b16 %v93
    %v151 = vunpack.c.l.b16 %v94
    %v152 = vunpack.c.h.b16 %v94
    %v153 = vunpack.c.l.b16 %v95
    %v154 = vunpack.c.h.b16 %v95
    %v155 = vunpack.c.l.b16 %v96
    %v156 = vunpack.c.h.b16 %v96
    %v157 = vunpack.c.l.b16 %v97
    %v158 = vunpack.c.h.b16 %v97
    %v159 = vunpack.c.l.b16 %v98
    %v160 = vunpack.c.h.b16 %v98
    %v161 = vunpack.c.l.b16 %v99
    %v162 = vunpack.c.h.b16 %v99
    %v163 = vunpack.c.l.b16 %v100
    %v164 = vunpack.c.h.b16 %v100
    %v165 = vunpack.c.l.b16 %v101
    %v166 = vunpack.c.h.b16 %v101
    %v167 = vunpack.c.l.b16 %v102
    %v168 = vunpack.c.h.b16 %v102
    %v169 = vpack.c.b16 %v139, %v137
    %v170 = vpack.c.b16 %v140, %v138
    %v171 = vpack.c.b16 %v143, %v141
    %v172 = vpack.c.b16 %v144, %v142
    %v173 = vpack.c.b16 %v147, %v145
    %v174 = vpack.c.b16 %v148, %v146
    %v175 = vpack.c.b16 %v151, %v149
    %v176 = vpack.c.b16 %v152, %v150
    %v177 = vpack.c.b16 %v155, %v153
    %v178 = vpack.c.b16 %v156, %v154
    %v179 = vpack.c.b16 %v159, %v157
    %v180 = vpack.c.b16 %v160, %v158
    %v181 = vpack.c.b16 %v163, %v161
    %v182 = vpack.c.b16 %v164, %v162
    %v183 = vpack.c.b16 %v167, %v165
    %v184 = vpack.c.b16 %v168, %v166
    %201 = vmatpush.bf16.msra.mxu0 %v183
    %202 = vmatpush.bf16.msra.mxu0 %v181
    %203 = vmatpush.bf16.msra.mxu0 %v179
    %204 = vmatpush.bf16.msra.mxu0 %v177
    %205 = vmatpush.bf16.msra.mxu0 %v175
    %206 = vmatpush.bf16.msra.mxu0 %v173
    %207 = vmatpush.bf16.msra.mxu0 %v171
    %208 = vmatpush.bf16.msra.mxu0 %v169
    %209 = vmatmul.bf16.gmra.mxu0 %v117
    %v210 = vpop.f32.mrf.mxu0
    %v211 = vadd.f32 %v105, %v210
    %v212 = vpop.f32.mrf.mxu0
    %v213 = vadd.f32 %v105, %v212
    %214 = vmatmul.bf16.gmra.mxu0 %v118
    %v215 = vpop.f32.mrf.mxu0
    %v216 = vadd.f32 %v105, %v215
    %v217 = vpop.f32.mrf.mxu0
    %v218 = vadd.f32 %v105, %v217
    %219 = vdwg.mxu0
    %220 = vmatpush.bf16.msra.mxu0 %v184
    %221 = vmatpush.bf16.msra.mxu0 %v182
    %222 = vmatpush.bf16.msra.mxu0 %v180
    %223 = vmatpush.bf16.msra.mxu0 %v178
    %224 = vmatpush.bf16.msra.mxu0 %v176
    %225 = vmatpush.bf16.msra.mxu0 %v174
    %226 = vmatpush.bf16.msra.mxu0 %v172
    %227 = vmatpush.bf16.msra.mxu0 %v170
    %228 = vmatmul.bf16.gmra.mxu0 %v117
    %v229 = vpop.f32.mrf.mxu0
    %v230 = vadd.f32 %v106, %v229
    %v231 = vpop.f32.mrf.mxu0
    %v232 = vadd.f32 %v106, %v231
    %233 = vmatmul.bf16.gmra.mxu0 %v118
    %v234 = vpop.f32.mrf.mxu0
    %v235 = vadd.f32 %v106, %v234
    %v236 = vpop.f32.mrf.mxu0
    %v237 = vadd.f32 %v106, %v236
    %238 = vdwg.mxu0
    %v239 = vpack.c.bf16 %v230, %v211
    %v240 = vpack.c.bf16 %v232, %v213
    %v241 = vpack.c.bf16 %v235, %v216
    %v242 = vpack.c.bf16 %v237, %v218
    %243 = vst [vmem:[#allocation10] sm:$0xff] %v239
    %244 = vst [vmem:[#allocation10 + $0x8] sm:$0xff] %v240
    %245 = vst [vmem:[#allocation10 + $0x10] sm:$0xff] %v241
    %246 = vst [vmem:[#allocation10 + $0x18] sm:$0xff] %v242
    %v247 = vld [vmem:[#allocation8] sm:$0xf]
    %v248 = vld [vmem:[#allocation8 + $0x4] sm:$0xf]
    %v249 = vld [vmem:[#allocation8 + $0x8] sm:$0xf]
    %v250 = vld [vmem:[#allocation8 + $0xc] sm:$0xf]
    %v253 = vunpack.c.l.b16 %v247
    %v254 = vunpack.c.l.b16 %v248
    %v255 = vpack.c.b16 %v254, %v253
    %v258 = vunpack.c.l.b16 %v239
    %v259 = vunpack.c.h.b16 %v239
    %v260 = vunpack.c.l.b16 %v240
    %v261 = vunpack.c.h.b16 %v240
    %v262 = vpack.c.b16 %v260, %v258
    %v263 = vpack.c.b16 %v261, %v259
    %vm266 = vcmask 130048
    %v268 = vsel %vm266, %v255, 0
    %270 = vmatpush.bf16.msra.mxu0 0
    %271 = vmatpush.bf16.msra.mxu0 0
    %272 = vmatpush.bf16.msra.mxu0 0
    %273 = vmatpush.bf16.msra.mxu0 0
    %274 = vmatpush.bf16.msra.mxu0 0
    %275 = vmatpush.bf16.msra.mxu0 0
    %276 = vmatpush.bf16.msra.mxu0 0
    %277 = vmatpush.bf16.msra.mxu0 %v262
    %278 = vmatmul.bf16.gmra.mxu0 %v268
    %v279 = vpop.f32.mrf.mxu0
    %v280 = vadd.f32 0.0, %v279
    %v281 = vpop.f32.mrf.mxu0
    %v282 = vadd.f32 0.0, %v281
    %283 = vdwg.mxu0
    %284 = vmatpush.bf16.msra.mxu0 0
    %285 = vmatpush.bf16.msra.mxu0 0
    %286 = vmatpush.bf16.msra.mxu0 0
    %287 = vmatpush.bf16.msra.mxu0 0
    %288 = vmatpush.bf16.msra.mxu0 0
    %289 = vmatpush.bf16.msra.mxu0 0
    %290 = vmatpush.bf16.msra.mxu0 0
    %291 = vmatpush.bf16.msra.mxu0 %v263
    %292 = vmatmul.bf16.gmra.mxu0 %v268
    %v293 = vpop.f32.mrf.mxu0
    %v294 = vadd.f32 0.0, %v293
    %v295 = vpop.f32.mrf.mxu0
    %v296 = vadd.f32 0.0, %v295
    %297 = vdwg.mxu0
    %v300 = vunpack.c.l.b16 %v249
    %v301 = vunpack.c.l.b16 %v250
    %v302 = vpack.c.b16 %v301, %v300
    %v305 = vunpack.c.l.b16 %v241
    %v306 = vunpack.c.h.b16 %v241
    %v307 = vunpack.c.l.b16 %v242
    %v308 = vunpack.c.h.b16 %v242
    %v309 = vpack.c.b16 %v307, %v305
    %v310 = vpack.c.b16 %v308, %v306
    %v314 = vsel %vm266, %v302, 0
    %316 = vmatpush.bf16.msra.mxu0 0
    %317 = vmatpush.bf16.msra.mxu0 0
    %318 = vmatpush.bf16.msra.mxu0 0
    %319 = vmatpush.bf16.msra.mxu0 0
    %320 = vmatpush.bf16.msra.mxu0 0
    %321 = vmatpush.bf16.msra.mxu0 0
    %322 = vmatpush.bf16.msra.mxu0 0
    %323 = vmatpush.bf16.msra.mxu0 %v309
    %324 = vmatmul.bf16.gmra.mxu0 %v314
    %v325 = vpop.f32.mrf.mxu0
    %v326 = vadd.f32 0.0, %v325
    %v327 = vpop.f32.mrf.mxu0
    %v328 = vadd.f32 0.0, %v327
    %329 = vdwg.mxu0
    %330 = vmatpush.bf16.msra.mxu0 0
    %331 = vmatpush.bf16.msra.mxu0 0
    %332 = vmatpush.bf16.msra.mxu0 0
    %333 = vmatpush.bf16.msra.mxu0 0
    %334 = vmatpush.bf16.msra.mxu0 0
    %335 = vmatpush.bf16.msra.mxu0 0
    %336 = vmatpush.bf16.msra.mxu0 0
    %337 = vmatpush.bf16.msra.mxu0 %v310
    %338 = vmatmul.bf16.gmra.mxu0 %v314
    %v339 = vpop.f32.mrf.mxu0
    %v340 = vadd.f32 0.0, %v339
    %v341 = vpop.f32.mrf.mxu0
    %v342 = vadd.f32 0.0, %v341
    %343 = vdwg.mxu0
    %v344 = vmul.f32 %v280, %v280
    %v345 = vmul.f32 %v294, %v294
    %v346 = vmul.f32 %v282, %v282
    %v347 = vmul.f32 %v296, %v296
    %v348 = vmul.f32 %v326, %v326
    %v349 = vmul.f32 %v340, %v340
    %v350 = vmul.f32 %v328, %v328
    %v351 = vmul.f32 %v342, %v342
    %v352 = vadd.f32 %v344, %v345
    %353 = vadd.xlane.f32.xlu0 %v352
    %v354 = vpop.xlane.xlu0 %353
    %v355 = vadd.f32 %v346, %v347
    %356 = vadd.xlane.f32.xlu0 %v355
    %v357 = vpop.xlane.xlu0 %356
    %v358 = vadd.f32 %v348, %v349
    %359 = vadd.xlane.f32.xlu0 %v358
    %v360 = vpop.xlane.xlu0 %359
    %v361 = vadd.f32 %v350, %v351
    %362 = vadd.xlane.f32.xlu0 %v361
    %v363 = vpop.xlane.xlu0 %362
    %v364 = vrsqrt.pop %v354
    %v365 = vmul.f32 %v364, %v354
    %v366 = vmul.f32 %v365, %v364
    %v367 = vmul.f32 0.5, %v366
    %v368 = vsub.f32 1.5, %v367
    %v369 = vmul.f32 %v364, %v368
    %v370 = vmul.f32 %v354, %v369
    %vm371 = vcmp.eq.f32.partialorder %v354, inf
    %v372 = vsel %vm371, %v354, %v370
    %vm373 = vcmp.eq.f32.partialorder %v354, 0.0
    %v374 = vand.u32 %v354, 2147483648
    %v375 = vsel %vm373, %v374, %v372
    %v376 = vrsqrt.pop %v357
    %v377 = vmul.f32 %v376, %v357
    %v378 = vmul.f32 %v377, %v376
    %v379 = vmul.f32 0.5, %v378
    %v380 = vsub.f32 1.5, %v379
    %v381 = vmul.f32 %v376, %v380
    %v382 = vmul.f32 %v357, %v381
    %vm383 = vcmp.eq.f32.partialorder %v357, inf
    %v384 = vsel %vm383, %v357, %v382
    %vm385 = vcmp.eq.f32.partialorder %v357, 0.0
    %v386 = vand.u32 %v357, 2147483648
    %v387 = vsel %vm385, %v386, %v384
    %v388 = vrsqrt.pop %v360
    %v389 = vmul.f32 %v388, %v360
    %v390 = vmul.f32 %v389, %v388
    %v391 = vmul.f32 0.5, %v390
    %v392 = vsub.f32 1.5, %v391
    %v393 = vmul.f32 %v388, %v392
    %v394 = vmul.f32 %v360, %v393
    %vm395 = vcmp.eq.f32.partialorder %v360, inf
    %v396 = vsel %vm395, %v360, %v394
    %vm397 = vcmp.eq.f32.partialorder %v360, 0.0
    %v398 = vand.u32 %v360, 2147483648
    %v399 = vsel %vm397, %v398, %v396
    %v400 = vrsqrt.pop %v363
    %v401 = vmul.f32 %v400, %v363
    %v402 = vmul.f32 %v401, %v400
    %v403 = vmul.f32 0.5, %v402
    %v404 = vsub.f32 1.5, %v403
    %v405 = vmul.f32 %v400, %v404
    %v406 = vmul.f32 %v363, %v405
    %vm407 = vcmp.eq.f32.partialorder %v363, inf
    %v408 = vsel %vm407, %v363, %v406
    %vm409 = vcmp.eq.f32.partialorder %v363, 0.0
    %v410 = vand.u32 %v363, 2147483648
    %v411 = vsel %vm409, %v410, %v408
    %v412 = vmax.f32 %v375, 1e-12
    %v413 = vmax.f32 %v387, 1e-12
    %v414 = vmax.f32 %v399, 1e-12
    %v415 = vmax.f32 %v411, 1e-12
    %v416 = vrcp.pop %v412
    %v417 = vmul.f32 %v412, %v416
    %v418 = vsub.f32 1.0, %v417
    %v419 = vmul.f32 %v416, %v418
    %v420 = vadd.f32 %v416, %v419
    %vm421 = vweird.f32 %v412
    %vm422 = vweird.f32 %v416
    %vm423 = vmor %vm421, %vm422
    %v424 = vsel %vm423, %v416, %v420
    %v425 = vand.u32 2147483647, %v412
    %vm426 = vcmp.eq.f32.partialorder %v425, 8.507059e+37
    %v427 = vand.u32 %v412, 2147483648
    %v428 = vor.u32 1.1754944e-38, %v427
    %v429 = vsel %vm426, %v428, %v424
    %v430 = vmul.f32 %v280, %v429
    %v431 = vmul.f32 %v294, %v429
    %v432 = vrcp.pop %v413
    %v433 = vmul.f32 %v413, %v432
    %v434 = vsub.f32 1.0, %v433
    %v435 = vmul.f32 %v432, %v434
    %v436 = vadd.f32 %v432, %v435
    %vm437 = vweird.f32 %v413
    %vm438 = vweird.f32 %v432
    %vm439 = vmor %vm437, %vm438
    %v440 = vsel %vm439, %v432, %v436
    %v441 = vand.u32 2147483647, %v413
    %vm442 = vcmp.eq.f32.partialorder %v441, 8.507059e+37
    %v443 = vand.u32 %v413, 2147483648
    %v444 = vor.u32 1.1754944e-38, %v443
    %v445 = vsel %vm442, %v444, %v440
    %v446 = vmul.f32 %v282, %v445
    %v447 = vmul.f32 %v296, %v445
    %v448 = vrcp.pop %v414
    %v449 = vmul.f32 %v414, %v448
    %v450 = vsub.f32 1.0, %v449
    %v451 = vmul.f32 %v448, %v450
    %v452 = vadd.f32 %v448, %v451
    %vm453 = vweird.f32 %v414
    %vm454 = vweird.f32 %v448
    %vm455 = vmor %vm453, %vm454
    %v456 = vsel %vm455, %v448, %v452
    %v457 = vand.u32 2147483647, %v414
    %vm458 = vcmp.eq.f32.partialorder %v457, 8.507059e+37
    %v459 = vand.u32 %v414, 2147483648
    %v460 = vor.u32 1.1754944e-38, %v459
    %v461 = vsel %vm458, %v460, %v456
    %v462 = vmul.f32 %v326, %v461
    %v463 = vmul.f32 %v340, %v461
    %v464 = vrcp.pop %v415
    %v465 = vmul.f32 %v415, %v464
    %v466 = vsub.f32 1.0, %v465
    %v467 = vmul.f32 %v464, %v466
    %v468 = vadd.f32 %v464, %v467
    %vm469 = vweird.f32 %v415
    %vm470 = vweird.f32 %v464
    %vm471 = vmor %vm469, %vm470
    %v472 = vsel %vm471, %v464, %v468
    %v473 = vand.u32 2147483647, %v415
    %vm474 = vcmp.eq.f32.partialorder %v473, 8.507059e+37
    %v475 = vand.u32 %v415, 2147483648
    %v476 = vor.u32 1.1754944e-38, %v475
    %v477 = vsel %vm474, %v476, %v472
    %v478 = vmul.f32 %v328, %v477
    %v479 = vmul.f32 %v342, %v477
    %480 = vst [vmem:[#allocation11] sm:$0xff] %v430
    %481 = vst [vmem:[#allocation11 + $0x8] sm:$0xff] %v431
    %482 = vst [vmem:[#allocation11 + $0x10] sm:$0xff] %v446
    %483 = vst [vmem:[#allocation11 + $0x18] sm:$0xff] %v447
    %484 = vst [vmem:[#allocation11 + $0x20] sm:$0xff] %v462
    %485 = vst [vmem:[#allocation11 + $0x28] sm:$0xff] %v463
    %486 = vst [vmem:[#allocation11 + $0x30] sm:$0xff] %v478
    %487 = vst [vmem:[#allocation11 + $0x38] sm:$0xff] %v479
    // Predicated region
    $region34: #{tpu_custom_call.1} parent=1 // pred_check
      _
    $region35: #{tpu_custom_call.1} parent=1 // pred_check_branch
      %489 = sbr.rel (0) target = $region37
    $region36: #{tpu_custom_call.1} parent=1 // pred_region
      %491 = vsyncadd [#allocation4], 0
      %s492 = sshll.u32 [#allocation10], 4
      %s493 = int_to_ptr.vmem [resolvable:$true] %s492
      %s494 = sshll.u32 %s4, 4
      %s495 = int_to_ptr.hbm [resolvable:$true] %s494
      %500 = dma.vmem_to_hbm [thread:$0]  %s493, 512, %s495, [#allocation4], 128, 128, 8
    $region37: #{tpu_custom_call.1} parent=1 // pred_fallthru
      _
    // Predicated region
    $region38: #{tpu_custom_call.1} parent=1 // pred_check
      _
    $region39: #{tpu_custom_call.1} parent=1 // pred_check_branch
      %502 = sbr.rel (0) target = $region41
    $region40: #{tpu_custom_call.1} parent=1 // pred_region
      %504 = vsyncadd [#allocation12], 0
      %s505 = sshll.u32 [#allocation11], 4
      %s506 = int_to_ptr.vmem [resolvable:$true] %s505
      %s507 = sshll.u32 %s5, 4
      %s508 = int_to_ptr.hbm [resolvable:$true] %s507
      %513 = dma.vmem_to_hbm [thread:$0]  %s506, 1024, %s508, [#allocation12], 256, 256, 16
    $region41: #{tpu_custom_call.1} parent=1 // pred_fallthru
      _
    // Predicated region
    $region42: #{tpu_custom_call.1} parent=1 // pred_check
      _
    $region43: #{tpu_custom_call.1} parent=1 // pred_check_branch
      %515 = sbr.rel (0) target = $region45
    $region44: #{tpu_custom_call.1} parent=1 // pred_region
      %517 = dma.done [#allocation4], 512
    $region45: #{tpu_custom_call.1} parent=1 // pred_fallthru
      _
    // Predicated region
    $region46: #{tpu_custom_call.1} parent=1 // pred_check
      _
    $region47: #{tpu_custom_call.1} parent=1 // pred_check_branch
      %519 = sbr.rel (0) target = $region49
    $region48: #{tpu_custom_call.1} parent=1 // pred_region
      %521 = dma.done [#allocation12], 1024
    $region49: #{tpu_custom_call.1} parent=1 // pred_fallthru
      _
    %522 = vsyncpa [#allocation3], 1
    %523 = vsyncpa [#allocation6], 1
    %524 = vsyncpa [#allocation9], 1
    %525 = vsyncpa [#allocation4], 1
    %526 = vsyncpa [#allocation12], 1

</llo_original>
